<compile_context>
chip_gen: v6e
topology: v6e:2x2x1
jax: 0.10.0
libtpu: 0.0.40
codegen_flags: <defaults>
</compile_context>

<pallas_src>
import functools

import jax
import jax.numpy as jnp
from jax.experimental import pallas as pl
from jax.experimental.pallas import tpu as pltpu


def _gat_kernel(x_ref, w_ref, adj_ref, out_ref,
                deg_ref, xsum_ref, agg_ref, *, matmul_dtype, inv_n):
    # x_ref   : [TK, C]      neighbour tile of node features (f32)
    # w_ref   : [C, H*C]     pre-folded all-head projection (matmul_dtype), resident
    # adj_ref : [TN, TK]     int8 {0,1} adjacency tile
    # out_ref : [TN, H*C]    lane-dense output tile (written at last neighbour step)
    # deg_ref : [TN, 1] f32  running neighbour count
    # xsum_ref: [1,  C] f32  running column-sum of x (isolated-row fallback)
    # agg_ref : [TN, C] f32  running (unnormalised) e @ x
    k = pl.program_id(1)

    @pl.when(k == 0)
    def _init():
        deg_ref[...] = jnp.zeros_like(deg_ref)
        xsum_ref[...] = jnp.zeros_like(xsum_ref)
        agg_ref[...] = jnp.zeros_like(agg_ref)

    # Adjacency arrives already binarised to {0, 1}; just widen it.
    e = adj_ref[...].astype(jnp.float32)                       # [TN, TK]
    x = x_ref[...]                                             # [TK, C] f32

    deg_ref[...] += jnp.sum(e, axis=1, keepdims=True)          # exact integer counts
    xsum_ref[...] += jnp.sum(x, axis=0, keepdims=True)

    # O(N^2)-scale matmul with output width C (reassociated ordering).
    agg_ref[...] += jnp.dot(e.astype(matmul_dtype), x.astype(matmul_dtype),
                            preferred_element_type=jnp.float32)

    @pl.when(k == pl.num_programs(1) - 1)
    def _finalize():
        deg = deg_ref[...]                                     # [TN, 1] f32
        inv_deg = pl.reciprocal(jnp.maximum(deg, 1.0), approx=True)
        uniform = jnp.broadcast_to(xsum_ref[...] * inv_n, agg_ref.shape)
        agg = jnp.where(deg > 0.0, agg_ref[...] * inv_deg, uniform)   # [TN, C] f32
        # Per-head projection applied once per row tile: [TN, C] @ [C, H*C].
        out_ref[...] = jnp.dot(agg.astype(matmul_dtype), w_ref[...],
                               preferred_element_type=jnp.float32
                               ).astype(out_ref.dtype)


def fold_gat_weights(linear_w):
    """One-time (parameter-init) fold of per-head weights into [C, H*C_out].

    value[h, n, a] = sum_b W[h, a, b] * x[n, b]  ->  w_all[b, h*C_out + a] = W[h, a, b]
    The module's matmul chain requires in_channels == out_channels.
    """
    h, c_in, c_out = linear_w.shape
    assert c_in == c_out, "GATLayer's matmul chain requires in_channels == out_channels"
    return jnp.transpose(linear_w, (2, 0, 1)).reshape(c_in, h * c_out)


@functools.partial(jax.jit,
                   static_argnames=("block_rows", "block_nbrs", "matmul_dtype"))
def gat_layer_forward(x, adj_mask, w_all, *,
                      block_rows=None, block_nbrs=None,
                      matmul_dtype=jnp.bfloat16):
    """Pallas implementation of GATLayer.forward (dense adjacency precomputed).

    Args:
      x        : [N, C] node features (f32).
      adj_mask : [N, N] adjacency; ideally an int8 {0,1} mask (binarised once
                 per graph).  Any other dtype is binarised here (trace-time
                 dtype check, no cost when already int8).
      w_all    : [C, H*C] folded projection from fold_gat_weights().
      block_rows / block_nbrs: optional node-row / neighbour tile sizes for
                 large N (must divide N; multiples of 32 / 128 respectively to
                 respect int8 (32,128) tiling).  Defaults: whole graph in one
                 block, which is what runs at N=16.
      matmul_dtype: MXU operand dtype (bf16 default; normalisation stays f32).
    Returns [N, H*C] f32 in the module's permute(1,0,2).reshape layout.
    """
    n, c = x.shape
    c_w, hc = w_all.shape
    assert c_w == c

    if adj_mask.dtype != jnp.int8:
        adj_mask = (adj_mask != 0).astype(jnp.int8)
    w_mm = w_all.astype(matmul_dtype)

    tn = n if block_rows is None else block_rows
    tk = n if block_nbrs is None else block_nbrs
    if block_rows is not None:
        assert n % block_rows == 0 and block_rows % 32 == 0
    if block_nbrs is not None:
        assert n % block_nbrs == 0 and block_nbrs % 128 == 0

    # NOTE(v7x): with >1 row tile the "parallel" axis shards across both
    # TensorCores; at N=16 the grid is (1, 1).  For very large N, shrink
    # tn / tk (int8 adjacency makes this cheap) to stay under v7x's 64 MiB
    # VMEM instead of raising vmem_limit_bytes.
    grid = (n // tn, n // tk)

    kernel = functools.partial(_gat_kernel,
                               matmul_dtype=matmul_dtype,
                               inv_n=float(1.0 / n))

    return pl.pallas_call(
        kernel,
        out_shape=jax.ShapeDtypeStruct((n, hc), jnp.float32),
        grid_spec=pltpu.PrefetchScalarGridSpec(
            num_scalar_prefetch=0,
            grid=grid,
            in_specs=[
                pl.BlockSpec((tk, c), lambda i, k: (k, 0)),    # x: neighbour tile
                pl.BlockSpec((c, hc), lambda i, k: (0, 0)),    # folded weights: resident
                pl.BlockSpec((tn, tk), lambda i, k: (i, k)),   # int8 adjacency tile
            ],
            out_specs=pl.BlockSpec((tn, hc), lambda i, k: (i, 0)),
            scratch_shapes=[
                pltpu.VMEM((tn, 1), jnp.float32),   # degree accumulator
                pltpu.VMEM((1, c), jnp.float32),    # column-sum of x (isolated rows)
                pltpu.VMEM((tn, c), jnp.float32),   # e @ x accumulator
            ],
        ),
        compiler_params=pltpu.CompilerParams(
            dimension_semantics=("parallel", "arbitrary")),
    )(x, w_mm, adj_mask)


# TODO(synk): to_dense_adj's data-dependent scatter stays as XLA glue (a Pallas
# DMA-scatter is not worthwhile at this size); it is per-graph preprocessing,
# not per-forward work.
def to_dense_adj(edge_index, num_nodes):
    """JAX equivalent of torch_geometric.utils.to_dense_adj (batch of 1)."""
    src, dst = edge_index[0], edge_index[1]
    adj = jnp.zeros((num_nodes, num_nodes), jnp.float32)
    return adj.at[src, dst].add(1.0)


def gat_reference(x, adj, linear_w, query_w, key_w, *, slope=0.2):
    """Pure-JAX faithful replica of the PyTorch forward, for verification."""
    n = x.shape[0]
    h, _, c_out = linear_w.shape
    lin = jnp.einsum('hab,nb->han', linear_w, x)            # [H, C, N]
    query = jnp.einsum('hoa,han->hon', query_w, lin)        # [H, 1, N]
    key = jnp.einsum('hoa,han->hon', key_w, lin)            # [H, 1, N]
    value = jnp.transpose(lin, (0, 2, 1))                   # [H, N, C]
    att = jnp.einsum('hon,hpn->hop', query, key)            # [H, 1, 1]
    att = jnp.where(att >= 0, att, slope * att)             # LeakyReLU
    masked = jnp.where(adj[None] == 0.0, -1e9, att)         # [H, N, N]
    p = jax.nn.softmax(masked, axis=2)
    out = jnp.einsum('hij,hjd->hid', p, value)              # [H, N, C]
    return jnp.transpose(out, (1, 0, 2)).reshape(n, h * c_out)


if __name__ == "__main__":
    NUM_NODES = 16
    NUM_HEADS = 4
    IN_CHANNELS = 32
    OUT_CHANNELS = 32   # module's matmul chain requires in_channels == out_channels
    NUM_EDGES = 40
    SLOPE = 0.2

    key = jax.random.PRNGKey(0)
    k_x, k_w, k_q, k_k, k_e = jax.random.split(key, 5)

    x = jax.random.normal(k_x, (NUM_NODES, IN_CHANNELS), jnp.float32)
    linear_weight = jax.random.normal(
        k_w, (NUM_HEADS, IN_CHANNELS, OUT_CHANNELS), jnp.float32)
    query_weight = jax.random.normal(k_q, (NUM_HEADS, 1, OUT_CHANNELS), jnp.float32)
    key_weight = jax.random.normal(k_k, (NUM_HEADS, 1, OUT_CHANNELS), jnp.float32)

    edge_index = jax.random.randint(
        k_e, (2, NUM_EDGES), minval=0, maxval=NUM_NODES, dtype=jnp.int32)

    # Per-graph preprocessing (outside the hot path): dense adjacency (PyG
    # semantics, float counts) and its int8 {0,1} mask for the kernel.
    adj = to_dense_adj(edge_index, NUM_NODES)
    adj_mask = (adj != 0).astype(jnp.int8)

    # Parameter-init-time weight fold (not per-call glue).
    w_all = fold_gat_weights(linear_weight)

    # Default path: bf16 MXU operands, f32 accumulation / normalisation.
    out = gat_layer_forward(x, adj_mask, w_all)
    out = jax.block_until_ready(out)

    # f32-matmul variant for a tight numerical check.
    out_f32 = gat_layer_forward(x, adj_mask, w_all, matmul_dtype=jnp.float32)
    out_f32 = jax.block_until_ready(out_f32)

    ref = gat_reference(x, adj, linear_weight, query_weight, key_weight,
                        slope=SLOPE)
    ref = jax.block_until_ready(ref)

    assert out.shape == (NUM_NODES, NUM_HEADS * OUT_CHANNELS)
    # f32 path: only approx-reciprocal + matmul-reassociation rounding.
    assert jnp.allclose(out_f32, ref, rtol=1e-3, atol=1e-3), (
        f"f32 max abs err = {jnp.max(jnp.abs(out_f32 - ref))}")
    # bf16 path: tolerance set by bf16 operand rounding (~2^-9 relative).
    assert jnp.allclose(out, ref, rtol=5e-2, atol=1e-1), (
        f"bf16 max abs err = {jnp.max(jnp.abs(out - ref))}")

    print("KERNEL_OK")
</pallas_src>

<mosaic_0001>
module attributes {stable_mosaic.version = 11 : i64} {
  func.func @_gat_kernel(%arg0: i32, %arg1: i32, %arg2: memref<16x32xf32, #tpu.memory_space<vmem>>, %arg3: memref<32x128xbf16, #tpu.memory_space<vmem>>, %arg4: memref<16x16xi8, #tpu.memory_space<vmem>>, %arg5: memref<16x128xf32, #tpu.memory_space<vmem>>, %arg6: memref<16x1xf32, #tpu.memory_space<vmem>>, %arg7: memref<1x32xf32, #tpu.memory_space<vmem>>, %arg8: memref<16x32xf32, #tpu.memory_space<vmem>>) attributes {dimension_semantics = [#tpu.dimension_semantics<parallel>, #tpu.dimension_semantics<arbitrary>], iteration_bounds = array<i64: 1, 1>, scalar_prefetch = 0 : i64, scratch_operands = 3 : i64, tpu.core_type = #tpu.core_type<tc>, window_params = [{transform_indices = @transform_0, window_bounds = array<i64: 16, 32>}, {pipeline_mode = #tpu.pipeline_mode<synchronous>, transform_indices = @transform_1, window_bounds = array<i64: 32, 128>}, {transform_indices = @transform_2, window_bounds = array<i64: 16, 16>}, {transform_indices = @transform_3, window_bounds = array<i64: 16, 128>}]} {
    %c0_i32 = arith.constant 0 : i32
    %0 = arith.cmpi eq, %arg1, %c0_i32 : i32
    %1 = arith.extui %0 : i1 to i32
    %c0_i32_0 = arith.constant 0 : i32
    %2 = arith.cmpi ne, %1, %c0_i32_0 : i32
    scf.if %2 {
      %cst_20 = arith.constant 0.000000e+00 : f32
      %25 = vector.broadcast %cst_20 : f32 to vector<16x1xf32>
      %c0_21 = arith.constant 0 : index
      %c0_22 = arith.constant 0 : index
      %26 = vector.load %arg6[%c0_21, %c0_22] : memref<16x1xf32, #tpu.memory_space<vmem>>, vector<16x1xf32>
      tpu.vector_store %arg6[%c0_21, %c0_22], %25 {strides = array<i32>} : memref<16x1xf32, #tpu.memory_space<vmem>>, vector<16x1xf32>,
      %cst_23 = arith.constant 0.000000e+00 : f32
      %27 = vector.broadcast %cst_23 : f32 to vector<1x32xf32>
      %c0_24 = arith.constant 0 : index
      %c0_25 = arith.constant 0 : index
      %28 = vector.load %arg7[%c0_24, %c0_25] : memref<1x32xf32, #tpu.memory_space<vmem>>, vector<1x32xf32>
      tpu.vector_store %arg7[%c0_24, %c0_25], %27 {strides = array<i32>} : memref<1x32xf32, #tpu.memory_space<vmem>>, vector<1x32xf32>,
      %cst_26 = arith.constant 0.000000e+00 : f32
      %29 = vector.broadcast %cst_26 : f32 to vector<16x32xf32>
      %c0_27 = arith.constant 0 : index
      %c0_28 = arith.constant 0 : index
      %30 = vector.load %arg8[%c0_27, %c0_28] : memref<16x32xf32, #tpu.memory_space<vmem>>, vector<16x32xf32>
      tpu.vector_store %arg8[%c0_27, %c0_28], %29 {strides = array<i32>} : memref<16x32xf32, #tpu.memory_space<vmem>>, vector<16x32xf32>,
    } else {
    }
    %c0 = arith.constant 0 : index
    %c0_1 = arith.constant 0 : index
    %3 = vector.load %arg4[%c0, %c0_1] : memref<16x16xi8, #tpu.memory_space<vmem>>, vector<16x16xi8>
    %4 = arith.sitofp %3 : vector<16x16xi8> to vector<16x16xf32>
    %c0_2 = arith.constant 0 : index
    %c0_3 = arith.constant 0 : index
    %5 = vector.load %arg2[%c0_2, %c0_3] : memref<16x32xf32, #tpu.memory_space<vmem>>, vector<16x32xf32>
    %c0_4 = arith.constant 0 : index
    %c0_5 = arith.constant 0 : index
    %6 = vector.load %arg6[%c0_4, %c0_5] : memref<16x1xf32, #tpu.memory_space<vmem>>, vector<16x1xf32>
    %cst = arith.constant dense<0.000000e+00> : vector<16xf32>
    %7 = vector.multi_reduction <add>, %4, %cst [1] : vector<16x16xf32> to vector<16xf32>
    %8 = vector.shape_cast %7 : vector<16xf32> to vector<16x1xf32>
    %9 = arith.addf %6, %8 : vector<16x1xf32>
    %c0_6 = arith.constant 0 : index
    %c0_7 = arith.constant 0 : index
    %10 = vector.load %arg6[%c0_6, %c0_7] : memref<16x1xf32, #tpu.memory_space<vmem>>, vector<16x1xf32>
    tpu.vector_store %arg6[%c0_6, %c0_7], %9 {strides = array<i32>} : memref<16x1xf32, #tpu.memory_space<vmem>>, vector<16x1xf32>,
    %c0_8 = arith.constant 0 : index
    %c0_9 = arith.constant 0 : index
    %11 = vector.load %arg7[%c0_8, %c0_9] : memref<1x32xf32, #tpu.memory_space<vmem>>, vector<1x32xf32>
    %cst_10 = arith.constant dense<0.000000e+00> : vector<32xf32>
    %12 = vector.multi_reduction <add>, %5, %cst_10 [0] : vector<16x32xf32> to vector<32xf32>
    %13 = vector.shape_cast %12 : vector<32xf32> to vector<1x32xf32>
    %14 = arith.addf %11, %13 : vector<1x32xf32>
    %c0_11 = arith.constant 0 : index
    %c0_12 = arith.constant 0 : index
    %15 = vector.load %arg7[%c0_11, %c0_12] : memref<1x32xf32, #tpu.memory_space<vmem>>, vector<1x32xf32>
    tpu.vector_store %arg7[%c0_11, %c0_12], %14 {strides = array<i32>} : memref<1x32xf32, #tpu.memory_space<vmem>>, vector<1x32xf32>,
    %c0_13 = arith.constant 0 : index
    %c0_14 = arith.constant 0 : index
    %16 = vector.load %arg8[%c0_13, %c0_14] : memref<16x32xf32, #tpu.memory_space<vmem>>, vector<16x32xf32>
    %17 = arith.truncf %4 : vector<16x16xf32> to vector<16x16xbf16>
    %18 = arith.truncf %5 : vector<16x32xf32> to vector<16x32xbf16>
    %cst_15 = arith.constant dense<0.000000e+00> : vector<16x32xf32>
    %19 = tpu.matmul %17, %18, %cst_15 {dimension_numbers = #tpu.dot_dimension_numbers<[1], [0], [0], [1], [0, 0, 1, 1], [], []>} : vector<16x16xbf16>, vector<16x32xbf16>, vector<16x32xf32> -> vector<16x32xf32>
    %20 = arith.addf %16, %19 : vector<16x32xf32>
    %c0_16 = arith.constant 0 : index
    %c0_17 = arith.constant 0 : index
    %21 = vector.load %arg8[%c0_16, %c0_17] : memref<16x32xf32, #tpu.memory_space<vmem>>, vector<16x32xf32>
    tpu.vector_store %arg8[%c0_16, %c0_17], %20 {strides = array<i32>} : memref<16x32xf32, #tpu.memory_space<vmem>>, vector<16x32xf32>,
    %c0_i32_18 = arith.constant 0 : i32
    %22 = arith.cmpi eq, %arg1, %c0_i32_18 : i32
    %23 = arith.extui %22 : i1 to i32
    %c0_i32_19 = arith.constant 0 : i32
    %24 = arith.cmpi ne, %23, %c0_i32_19 : i32
    scf.if %24 {
      %c0_20 = arith.constant 0 : index
      %c0_21 = arith.constant 0 : index
      %25 = vector.load %arg6[%c0_20, %c0_21] : memref<16x1xf32, #tpu.memory_space<vmem>>, vector<16x1xf32>
      %cst_22 = arith.constant 1.000000e+00 : f32
      %26 = vector.broadcast %cst_22 : f32 to vector<16x1xf32>
      %27 = arith.maximumf %25, %26 : vector<16x1xf32>
      %28 = tpu.reciprocal %27 {approx = true} : vector<16x1xf32> -> vector<16x1xf32>
      %c0_23 = arith.constant 0 : index
      %c0_24 = arith.constant 0 : index
      %29 = vector.load %arg7[%c0_23, %c0_24] : memref<1x32xf32, #tpu.memory_space<vmem>>, vector<1x32xf32>
      %cst_25 = arith.constant 6.250000e-02 : f32
      %30 = vector.broadcast %cst_25 : f32 to vector<1x32xf32>
      %31 = arith.mulf %29, %30 : vector<1x32xf32>
      %32 = vector.shape_cast %31 : vector<1x32xf32> to vector<1x32xf32>
      %33 = vector.broadcast %32 : vector<1x32xf32> to vector<16x32xf32>
      %cst_26 = arith.constant 0.000000e+00 : f32
      %34 = vector.broadcast %cst_26 : f32 to vector<16x1xf32>
      %35 = arith.cmpf ogt, %25, %34 : vector<16x1xf32>
      %c0_27 = arith.constant 0 : index
      %c0_28 = arith.constant 0 : index
      %36 = vector.load %arg8[%c0_27, %c0_28] : memref<16x32xf32, #tpu.memory_space<vmem>>, vector<16x32xf32>
      %37 = vector.broadcast %28 : vector<16x1xf32> to vector<16x32xf32>
      %38 = arith.mulf %36, %37 : vector<16x32xf32>
      %39 = vector.shape_cast %35 : vector<16x1xi1> to vector<16x1xi1>
      %40 = vector.broadcast %39 : vector<16x1xi1> to vector<16x32xi1>
      %41 = arith.select %40, %38, %33 : vector<16x32xi1>, vector<16x32xf32>
      %42 = arith.truncf %41 : vector<16x32xf32> to vector<16x32xbf16>
      %c0_29 = arith.constant 0 : index
      %c0_30 = arith.constant 0 : index
      %43 = vector.load %arg3[%c0_29, %c0_30] : memref<32x128xbf16, #tpu.memory_space<vmem>>, vector<32x128xbf16>
      %cst_31 = arith.constant dense<0.000000e+00> : vector<16x128xf32>
      %44 = tpu.matmul %42, %43, %cst_31 {dimension_numbers = #tpu.dot_dimension_numbers<[1], [0], [0], [1], [0, 0, 1, 1], [], []>} : vector<16x32xbf16>, vector<32x128xbf16>, vector<16x128xf32> -> vector<16x128xf32>
      %c0_32 = arith.constant 0 : index
      %c0_33 = arith.constant 0 : index
      %45 = vector.load %arg5[%c0_32, %c0_33] : memref<16x128xf32, #tpu.memory_space<vmem>>, vector<16x128xf32>
      tpu.vector_store %arg5[%c0_32, %c0_33], %44 {strides = array<i32>} : memref<16x128xf32, #tpu.memory_space<vmem>>, vector<16x128xf32>,
    } else {
    }
    return
  }
  func.func @transform_0(%arg0: i32, %arg1: i32) -> (i32, i32) {
    %c0_i32 = arith.constant 0 : i32
    %c0_i32_0 = arith.constant 0 : i32
    return %arg1, %c0_i32 : i32, i32
  }
  func.func @transform_1(%arg0: i32, %arg1: i32) -> (i32, i32) {
    %c0_i32 = arith.constant 0 : i32
    %c0_i32_0 = arith.constant 0 : i32
    %c0_i32_1 = arith.constant 0 : i32
    return %c0_i32, %c0_i32_0 : i32, i32
  }
  func.func @transform_2(%arg0: i32, %arg1: i32) -> (i32, i32) {
    %c0_i32 = arith.constant 0 : i32
    return %arg0, %arg1 : i32, i32
  }
  func.func @transform_3(%arg0: i32, %arg1: i32) -> (i32, i32) {
    %c0_i32 = arith.constant 0 : i32
    %c0_i32_0 = arith.constant 0 : i32
    return %arg0, %c0_i32 : i32, i32
  }
}

</mosaic_0001>

<llo_original>
// kernel: gat_layer_forward.1
$region0: #{gat_layer_forward.1}
  #allocation0 [shape = 'u32[]', space=smem, size = 0x4, offset = 0x4, fixed_abs, tag = 'smem constant byte address 0x4 - core index']
  #allocation1 [shape = 'u32[144,128]{1,0:T(1,128)}', space=vmem, size = 0x12000, scoped, tag = 'internal scratch']
  #allocation2 [shape = 'f32[16,1]{1,0:T(8,128)}', space=vmem, size = 0x2000, scoped, tag = 'scratch operand']
  #allocation3 [shape = 'f32[1,32]{1,0:T(1,128)}', space=vmem, size = 0x200, scoped, tag = 'scratch operand']
  #allocation4 [shape = 'f32[16,32]{1,0:T(8,128)}', space=vmem, size = 0x2000, scoped, tag = 'scratch operand']
  %s0 = inlined_call_operand.vmem [shape: f32[16,32], index: 0, kind: input, shape index: {}]
  %s1 = inlined_call_operand.vmem [shape: bf16[32,128], index: 1, kind: input, shape index: {}]
  %s2 = inlined_call_operand.vmem [shape: s8[16,16], index: 2, kind: input, shape index: {}]
  %s3 = inlined_call_operand.hbm [shape: f32[16,128], index: 3, kind: output, shape index: {}]
  %s4 = sld [smem:[#allocation0]]
  $region30: #{gat_layer_forward.1} parent=0
    _
  %s6 = ssub.s32 1, %s4
  %s7 = scalar_select 0, %s6, %s4
  $region1: #{gat_layer_forward.1} parent=0
    #allocation5 [shape = 'u8[8192]{0}', space=vmem, size = 0x2000, scoped, tag = 'output window, operand 0, single buffered']
    #allocation6 [shape = 's32[1]{0}', space=sflag, size = 0x4, scoped, tag = 'scoped memory for gat_layer_forward.1']
    %8 = vsyncpa [#allocation6], 0
    // Predicated region
    $region2: #{gat_layer_forward.1} parent=1 // pred_check
      _
    $region3: #{gat_layer_forward.1} parent=1 // pred_check_branch
      %10 = sbr.rel (0) target = $region5
    $region4: #{gat_layer_forward.1} parent=1 // pred_region
      _
    $region5: #{gat_layer_forward.1} parent=1 // pred_fallthru
      _
    // Predicated region
    $region6: #{gat_layer_forward.1} parent=1 // pred_check
      _
    $region7: #{gat_layer_forward.1} parent=1 // pred_check_branch
      %12 = sbr.rel (0) target = $region9
    $region8: #{gat_layer_forward.1} parent=1 // pred_region
      _
    $region9: #{gat_layer_forward.1} parent=1 // pred_fallthru
      _
    // Predicated region
    $region10: #{gat_layer_forward.1} parent=1 // pred_check
      _
    $region11: #{gat_layer_forward.1} parent=1 // pred_check_branch
      %14 = sbr.rel (0) target = $region13
    $region12: #{gat_layer_forward.1} parent=1 // pred_region
      _
    $region13: #{gat_layer_forward.1} parent=1 // pred_fallthru
      _
    %p16 = scmp.eq.s32.totalorder 0, 0
    // Predicated region
    $region14: #{gat_layer_forward.1} parent=1 // pred_check
      %p17 = pneg %p16
    $region15: #{gat_layer_forward.1} parent=1 // pred_check_branch
      %19 = sbr.rel (%p17) target = $region17
    $region16: #{gat_layer_forward.1} parent=1 // pred_region
      %vm20 = vcmask 7168
      %21 = vst.msk [vmem:[#allocation2] sm:$0xff] %vm20, 0.0
      %22 = vst.msk [vmem:[#allocation2 + $0x8] sm:$0xff] %vm20, 0.0
      %vm23 = vcmask 253952
      %24 = vst.msk [vmem:[#allocation3] sm:$0x1] %vm23, 0.0
      %vm25 = vcmask 261120
      %26 = vst.msk [vmem:[#allocation4] sm:$0xff] %vm25, 0.0
      %27 = vst.msk [vmem:[#allocation4 + $0x8] sm:$0xff] %vm25, 0.0
    $region17: #{gat_layer_forward.1} parent=1 // pred_fallthru
      _
    %v28 = vld [vmem:[%s2] sm:$0x3]
    %v29 = vld [vmem:[%s2 + $0x2] sm:$0x3]
    %v30 = vunpack.c.0.s8 %v28
    %v31 = vunpack.c.0.s8 %v29
    %v32 = vcvt.s32.f32 %v30
    %v33 = vcvt.s32.f32 %v31
    %v34 = vld [vmem:[%s0] sm:$0xff]
    %v35 = vld [vmem:[%s0 + $0x8] sm:$0xff]
    %v36 = vld [vmem:[#allocation2] sm:$0xff]
    %v37 = vld [vmem:[#allocation2 + $0x8] sm:$0xff]
    %vm38 = vcmask 130048
    %v39 = vsel %vm38, %v32, 0.0
    %40 = vadd.xlane.f32.xlu0 %v39
    %v41 = vpop.xlane.xlu0 %40
    %v42 = vsel %vm38, %v33, 0.0
    %43 = vadd.xlane.f32.xlu0 %v42
    %v44 = vpop.xlane.xlu0 %43
    %v45 = vadd.f32 %v36, %v41
    %v46 = vadd.f32 %v37, %v44
    %vm47 = vcmask 7168
    %48 = vst.msk [vmem:[#allocation2] sm:$0xff] %vm47, %v45
    %49 = vst.msk [vmem:[#allocation2 + $0x8] sm:$0xff] %vm47, %v46
    %v50 = vld [vmem:[#allocation3] sm:$0x1]
    %vm51 = vcmask 261120
    %v52 = vsel %vm51, %v34, 0.0
    %v53 = vsel %vm51, %v35, 0.0
    %v54 = vadd.f32 %v52, %v53
    %v55 = vrot.slane %v54, 4
    %v56 = vadd.f32 %v54, %v55
    %v57 = vrot.slane %v56, 2
    %v58 = vadd.f32 %v56, %v57
    %v59 = vrot.slane %v58, 1
    %v60 = vadd.f32 %v58, %v59
    %v61 = vadd.f32 %v50, %v60
    %vm62 = vcmask 253952
    %63 = vst.msk [vmem:[#allocation3] sm:$0x1] %vm62, %v61
    %v64 = vld [vmem:[#allocation4] sm:$0xff]
    %v65 = vld [vmem:[#allocation4 + $0x8] sm:$0xff]
    %v66 = vunpack.c.l.s8.bf16 %v28
    %v67 = vunpack.c.l.s8.bf16 %v29
    %v68 = vpack.c.bf16 %v35, %v34
    %v71 = vunpack.c.l.b16 %v66
    %v72 = vunpack.c.l.b16 %v67
    %v73 = vpack.c.b16 %v72, %v71
    %v75 = vsel %vm38, %v73, 0
    %77 = vmatprep.subr.bf16.mxu0 0
    %78 = vmatpush1.bf16.msra.mxu0 0
    %79 = vmatprep.subr.bf16.mxu0 0
    %80 = vmatpush1.bf16.msra.mxu0 0
    %81 = vmatprep.subr.bf16.mxu0 0
    %82 = vmatpush1.bf16.msra.mxu0 0
    %83 = vmatprep.subr.bf16.mxu0 0
    %84 = vmatpush1.bf16.msra.mxu0 0
    %85 = vmatprep.subr.bf16.mxu0 0
    %86 = vmatpush1.bf16.msra.mxu0 0
    %87 = vmatprep.subr.bf16.mxu0 0
    %88 = vmatpush1.bf16.msra.mxu0 0
    %89 = vmatprep.subr.bf16.mxu0 0
    %90 = vmatpush1.bf16.msra.mxu0 0
    %91 = vmatprep.subr.bf16.mxu0 0
    %92 = vmatpush1.bf16.msra.mxu0 %v68
    %93 = vmatprep.subr.bf16.mxu0 0
    %94 = vmatpush2.bf16.msra.mxu0 0
    %95 = vmatprep.subr.bf16.mxu0 0
    %96 = vmatpush2.bf16.msra.mxu0 0
    %97 = vmatprep.subr.bf16.mxu0 0
    %98 = vmatpush2.bf16.msra.mxu0 0
    %99 = vmatprep.subr.bf16.mxu0 0
    %100 = vmatpush2.bf16.msra.mxu0 0
    %101 = vmatprep.subr.bf16.mxu0 0
    %102 = vmatpush2.bf16.msra.mxu0 0
    %103 = vmatprep.subr.bf16.mxu0 0
    %104 = vmatpush2.bf16.msra.mxu0 0
    %105 = vmatprep.subr.bf16.mxu0 0
    %106 = vmatpush2.bf16.msra.mxu0 0
    %107 = vmatprep.subr.bf16.mxu0 0
    %108 = vmatpush2.bf16.msra.mxu0 0
    %109 = vmatprep.mubr.bf16.mxu0 0
    %110 = vmatmul.mubr.bf16.gmra.mxu0 %v75
    %v111 = vpop.f32.mrf.mxu0
    %v112 = vadd.f32 0.0, %v111
    %v113 = vpop.f32.mrf.mxu0
    %v114 = vpop.f32.mrf.mxu0
    %v115 = vadd.f32 0.0, %v114
    %v116 = vpop.f32.mrf.mxu0
    %117 = vdwg.mxu0
    %v118 = vadd.f32 %v64, %v112
    %v119 = vadd.f32 %v65, %v115
    %120 = vst.msk [vmem:[#allocation4] sm:$0xff] %vm51, %v118
    %121 = vst.msk [vmem:[#allocation4 + $0x8] sm:$0xff] %vm51, %v119
    // Predicated region
    $region18: #{gat_layer_forward.1} parent=1 // pred_check
      %p122 = pneg %p16
    $region19: #{gat_layer_forward.1} parent=1 // pred_check_branch
      %124 = sbr.rel (%p122) target = $region21
    $region20: #{gat_layer_forward.1} parent=1 // pred_region
      %v125 = vld [vmem:[#allocation2] sm:$0xff]
      %v126 = vld [vmem:[#allocation2 + $0x8] sm:$0xff]
      %v127 = vmax.f32 %v125, 1.0
      %v128 = vmax.f32 %v126, 1.0
      %v129 = vrcp.pop %v127
      %v130 = vrcp.pop %v128
      %v131 = vld [vmem:[#allocation3] sm:$0x1]
      %v132 = vmul.f32 %v131, 0.0625
      %v134 = vlaneseq
      %v135 = vshrl.u32 %v134, 7
      %v136 = vsub.s32 0, %v135
      %v137 = vrot.slane %v132, %v136
      %vm139 = vcmp.gt.f32.partialorder %v125, 0.0
      %vm140 = vcmp.gt.f32.partialorder %v126, 0.0
      %v141 = vld [vmem:[#allocation4] sm:$0xff]
      %v142 = vld [vmem:[#allocation4 + $0x8] sm:$0xff]
      %144 = vset.pattern.permute.xlu0 0
      %145 = vperm.xlu0 %144, %v129
      %v146 = vpop.permute.xlu0 %145
      %149 = vset.pattern.permute.xlu0 0
      %150 = vperm.xlu0 %149, %v130
      %v151 = vpop.permute.xlu0 %150
      %v153 = vmul.f32 %v141, %v146
      %v154 = vmul.f32 %v142, %v151
      %v155 = vsel %vm139, 1, 0
      %v156 = vsel %vm140, 1, 0
      %157 = vset.pattern.permute.xlu0 0
      %158 = vperm.xlu0 %157, %v155
      %v159 = vpop.permute.xlu0 %158
      %160 = vset.pattern.permute.xlu0 0
      %161 = vperm.xlu0 %160, %v156
      %v162 = vpop.permute.xlu0 %161
      %vm163 = vcmp.eq.s32.totalorder %v159, 1
      %vm164 = vcmp.eq.s32.totalorder %v162, 1
      %v165 = vsel %vm163, %v153, %v137
      %v166 = vsel %vm164, %v154, %v137
      %v167 = vpack.c.bf16 %v166, %v165
      %v168 = vld [vmem:[%s1] sm:$0xf]
      %v169 = vld [vmem:[%s1 + $0x4] sm:$0xf]
      %v170 = vld [vmem:[%s1 + $0x8] sm:$0xf]
      %v171 = vld [vmem:[%s1 + $0xc] sm:$0xf]
      %v176 = vunpack.c.l.b16 %v168
      %v177 = vunpack.c.l.b16 %v169
      %v178 = vunpack.c.l.b16 %v170
      %v179 = vunpack.c.l.b16 %v171
      %v180 = vpack.c.b16 %v177, %v176
      %v181 = vpack.c.b16 %v179, %v178
      %v185 = vsel %vm51, %v167, 0
      %187 = vmatprep.subr.bf16.mxu0 0
      %188 = vmatpush1.bf16.msra.mxu0 0
      %189 = vmatprep.subr.bf16.mxu0 0
      %190 = vmatpush1.bf16.msra.mxu0 0
      %191 = vmatprep.subr.bf16.mxu0 0
      %192 = vmatpush1.bf16.msra.mxu0 0
      %193 = vmatprep.subr.bf16.mxu0 0
      %194 = vmatpush1.bf16.msra.mxu0 0
      %195 = vmatprep.subr.bf16.mxu0 0
      %196 = vmatpush1.bf16.msra.mxu0 0
      %197 = vmatprep.subr.bf16.mxu0 0
      %198 = vmatpush1.bf16.msra.mxu0 0
      %199 = vmatprep.subr.bf16.mxu0 0
      %200 = vmatpush1.bf16.msra.mxu0 %v181
      %201 = vmatprep.subr.bf16.mxu0 0
      %202 = vmatpush1.bf16.msra.mxu0 %v180
      %203 = vmatprep.subr.bf16.mxu0 0
      %204 = vmatpush2.bf16.msra.mxu0 0
      %205 = vmatprep.subr.bf16.mxu0 0
      %206 = vmatpush2.bf16.msra.mxu0 0
      %207 = vmatprep.subr.bf16.mxu0 0
      %208 = vmatpush2.bf16.msra.mxu0 0
      %209 = vmatprep.subr.bf16.mxu0 0
      %210 = vmatpush2.bf16.msra.mxu0 0
      %211 = vmatprep.subr.bf16.mxu0 0
      %212 = vmatpush2.bf16.msra.mxu0 0
      %213 = vmatprep.subr.bf16.mxu0 0
      %214 = vmatpush2.bf16.msra.mxu0 0
      %215 = vmatprep.subr.bf16.mxu0 0
      %216 = vmatpush2.bf16.msra.mxu0 0
      %217 = vmatprep.subr.bf16.mxu0 0
      %218 = vmatpush2.bf16.msra.mxu0 0
      %219 = vmatprep.mubr.bf16.mxu0 0
      %220 = vmatmul.mubr.bf16.gmra.mxu0 %v185
      %v221 = vpop.f32.mrf.mxu0
      %v222 = vadd.f32 0.0, %v221
      %v223 = vpop.f32.mrf.mxu0
      %v224 = vpop.f32.mrf.mxu0
      %v225 = vadd.f32 0.0, %v224
      %v226 = vpop.f32.mrf.mxu0
      %227 = vdwg.mxu0
      %228 = vst [vmem:[#allocation5] sm:$0xff] %v222
      %229 = vst [vmem:[#allocation5 + $0x8] sm:$0xff] %v225
    $region21: #{gat_layer_forward.1} parent=1 // pred_fallthru
      _
    // Predicated region
    $region22: #{gat_layer_forward.1} parent=1 // pred_check
      _
    $region23: #{gat_layer_forward.1} parent=1 // pred_check_branch
      %231 = sbr.rel (0) target = $region25
    $region24: #{gat_layer_forward.1} parent=1 // pred_region
      %s233 = ssub.s32 256, 256
      %234 = vsyncadd [#allocation6], %s233
      %s235 = sshll.u32 [#allocation5], 4
      %s236 = int_to_ptr.vmem [resolvable:$true] %s235
      %241 = dma.vmem_to_hbm [thread:$0]  %s236, 256, %s3, [#allocation6], 128, 128, 8
    $region25: #{gat_layer_forward.1} parent=1 // pred_fallthru
      _
    // Predicated region
    $region26: #{gat_layer_forward.1} parent=1 // pred_check
      _
    $region27: #{gat_layer_forward.1} parent=1 // pred_check_branch
      %243 = sbr.rel (0) target = $region29
    $region28: #{gat_layer_forward.1} parent=1 // pred_region
      %244 = dma.done [#allocation6], 256
    $region29: #{gat_layer_forward.1} parent=1 // pred_fallthru
      _
    %245 = vsyncpa [#allocation6], 1

</llo_original>
